<compile_context>
chip_gen: v6e
topology: v6e:2x2x1
jax: 0.10.0
libtpu: 0.0.40
codegen_flags: <defaults>
</compile_context>

<pallas_src>
import math

import jax
import jax.numpy as jnp
from jax.experimental import pallas as pl
from jax.experimental.pallas import tpu as pltpu


def _round_up(x: int, m: int) -> int:
    return ((x + m - 1) // m) * m


def _choose_tiles(n: int, tm, tn):
    """Pick (TM, TN) and padded extents.

    TN is kept modest (<=512) so the (TM,TN) f32 temporaries stay well inside
    v5e's 16 MiB scoped-VMEM default; TM is chosen so there are at least two
    row tiles whenever n >= 16 (megacore sharding of the parallel i axis on
    v7x), capped at 256.
    """
    if tn is None:
        tn = _round_up(n, 128) if n <= 512 else 512
    if tm is None:
        tm = min(256, max(8, _round_up((n + 1) // 2, 8)))
    assert tm % 8 == 0 and tn % 128 == 0, "TM must be %8==0, TN must be %128==0"
    n_rows = _round_up(n, tm)
    n_cols = _round_up(n, tn)
    return tm, tn, n_rows, n_cols


def _make_nkspl_kernel(an: float, sigma: float, n_real: int, n_cols_pad: int):
    """Builds the tiled kernel body, closing over static scalars."""
    nf = float(n_real)
    pdf_norm = 1.0 / (sigma * math.sqrt(2.0 * math.pi))
    # s = (e_i - e_j) / (an * sigma * sqrt(2)):
    #   Gaussian pdf kernel value = pdf_norm * exp(-s^2)
    #   Gaussian cdf value        = 0.5 * (1 + erf(s))
    c_erf = 1.0 / (an * sigma * math.sqrt(2.0))
    # tanh-based erf approximation: erf(s) ~= tanh(C1*s + C3*s^3)
    # (derived from the GELU tanh approximation; max abs error ~3.3e-4,
    #  saturates to exactly +/-1 in f32 for large |s|).
    C1 = 2.0 / math.sqrt(math.pi)
    C3 = 0.044715 * 2.0 * math.sqrt(2.0) * math.sqrt(2.0 / math.pi)
    cond_scale = pdf_norm / (nf * an)       # applied once per row
    eps_total = nf * 1e-32                  # hoisted per-element +1e-32
    surv_scale = 0.5 / nf                   # folds the 0.5*(1+erf) and /n
    cols_pad_f = float(n_cols_pad)          # padded cols contribute erf == -1
    neg_inv_n = -1.0 / nf

    def kernel(e_i_ref, e_j_ref, ev_j_ref, aux_i_ref, out_ref,
               cond_acc, surv_acc):
        j = pl.program_id(1)

        @pl.when(j == 0)
        def _():
            cond_acc[...] = jnp.zeros_like(cond_acc)
            surv_acc[...] = jnp.zeros_like(surv_acc)

        # (TM, TN) tile of scaled pairwise residual differences.
        s = (e_i_ref[...] - e_j_ref[...]) * c_erf
        s2 = s * s

        # Gaussian kernel value (EUP exp), weighted by events (lane-dense
        # (1,TN) row broadcast) and row-reduced on the XLU.  gauss is fully
        # consumed here before the erf chain is materialized.
        gauss = jnp.exp(-s2)
        cond_acc[...] += jnp.sum(gauss * ev_j_ref[...], axis=1, keepdims=True)

        # Gaussian cdf via tanh-erf: EUP tanh + 3 VALU ops (vs ~20+ VALU ops
        # for lax.erf), row-reduced on the XLU.
        erf_s = jnp.tanh(s * (C1 + C3 * s2))
        surv_acc[...] += jnp.sum(erf_s, axis=1, keepdims=True)

        @pl.when(j == pl.num_programs(1) - 1)
        def _():
            aux = aux_i_ref[...]                     # (TM, 2): [events, theta]
            ev = aux[:, 0:1]
            th = aux[:, 1:2]
            cond_e = cond_acc[...] * cond_scale + eps_total      # (TM, 1)
            surv = (surv_acc[...] + cols_pad_f) * surv_scale     # (TM, 1)
            contrib = (jnp.log(cond_e) - jnp.log(surv) + th) * (ev * neg_inv_n)
            # Padded rows (and censored rows) contribute exactly 0.
            out_ref[...] = jnp.where(ev > 0.0, contrib, 0.0)

    return kernel


def dart_nkspl_loss_pallas(theta, durations, events, an=1.0, sigma=1.0,
                           tm=None, tn=None):
    """Forward pass of dart_nkspl_loss on TPU (tiled Pallas kernel)."""
    theta = jnp.asarray(theta, jnp.float32)
    durations = jnp.asarray(durations, jnp.float32)
    events_f = jnp.asarray(events).astype(jnp.float32).reshape(-1)

    # e = -(theta - log(durations + 1e-32)); shape follows theta: (n, 1)
    e = -(theta - jnp.log(durations.reshape(-1, 1) + 1e-32))
    e_flat = e.reshape(-1)
    n = int(e_flat.shape[0])

    # Reproduce the reference permutation logic exactly:
    #   e_sorted      = e[argsort(e)]
    #   *_sorted rows = rows re-ordered by argsort(argsort(e)) (inverse perm)
    e_indices = jnp.argsort(e_flat)
    e_sorted = e_flat[e_indices]
    inv = jnp.argsort(e_indices)
    events_sorted = events_f[inv]
    theta_sorted = theta.reshape(-1)[inv]

    tm, tn, n_rows, n_cols = _choose_tiles(n, tm, tn)

    # Sentinel for padded e entries: far enough that the tanh-erf saturates to
    # exactly -1 and exp underflows to 0 for (real row, padded col) pairs.
    pad_val = jnp.max(e_sorted) + jnp.float32(40.0 * an * sigma + 1.0)

    def pad_to(x, length, value):
        return jnp.pad(x, (0, length - n), constant_values=value)

    e_i_col = pad_to(e_sorted, n_rows, pad_val).reshape(n_rows, 1)
    e_j_row = pad_to(e_sorted, n_cols, pad_val).reshape(1, n_cols)
    ev_j_row = pad_to(events_sorted, n_cols, 0.0).reshape(1, n_cols)
    # Finalize-only per-row data packed into one (n_rows, 2) block.
    aux_i = jnp.stack([pad_to(events_sorted, n_rows, 0.0),
                       pad_to(theta_sorted, n_rows, 0.0)], axis=1)

    kernel = _make_nkspl_kernel(float(an), float(sigma), n, n_cols)

    per_row = pl.pallas_call(
        kernel,
        out_shape=jax.ShapeDtypeStruct((n_rows, 1), jnp.float32),
        grid=(n_rows // tm, n_cols // tn),
        in_specs=[
            pl.BlockSpec((tm, 1), lambda i, j: (i, 0)),    # e (row tile, col vec)
            pl.BlockSpec((1, tn), lambda i, j: (0, j)),    # e (col tile, row vec)
            pl.BlockSpec((1, tn), lambda i, j: (0, j)),    # events (lane-dense row)
            pl.BlockSpec((tm, 2), lambda i, j: (i, 0)),    # [events, theta] finalize
        ],
        out_specs=pl.BlockSpec((tm, 1), lambda i, j: (i, 0)),
        scratch_shapes=[
            pltpu.VMEM((tm, 1), jnp.float32),              # cond_E accumulator
            pltpu.VMEM((tm, 1), jnp.float32),              # surv accumulator
        ],
        compiler_params=pltpu.CompilerParams(
            dimension_semantics=("parallel", "arbitrary"),
            vmem_limit_bytes=32 * 1024 * 1024),
    )(e_i_col, e_j_row, ev_j_row, aux_i)

    # Tiny O(n) final reduction; keeps the i grid axis carry-free/parallel.
    return jnp.sum(per_row)


class DARTNKSPLLoss:
    """JAX/Pallas port of the PyTorch DARTNKSPLLoss module (forward only)."""

    def __init__(self, an: float = 1.0, sigma: float = 1.0):
        self.an = an
        self.sigma = sigma
        # TODO(synk): the PyTorch forward optionally logs to wandb; no kernel
        # equivalent, intentionally omitted.

    def __call__(self, log_h, durations, events):
        return dart_nkspl_loss_pallas(log_h, durations, events,
                                      an=self.an, sigma=self.sigma)


def _dart_nkspl_loss_ref(theta, durations, events, an=1.0, sigma=1.0):
    """Pure-JAX reference mirroring the PyTorch code (exact erf), for validation."""
    theta = jnp.asarray(theta, jnp.float32)
    durations = jnp.asarray(durations, jnp.float32)
    e = -(theta - jnp.log(durations.reshape(-1, 1) + 1e-32))
    e_flat = e.reshape(-1)
    n = e_flat.shape[0]
    idx = jnp.argsort(e_flat)
    e_sorted = e_flat[idx]
    inv = jnp.argsort(idx)
    ev_s = jnp.asarray(events).astype(jnp.float32).reshape(-1)[inv]
    th_s = theta.reshape(-1)[inv]
    d = (e_sorted[:, None] - e_sorted[None, :]) / an
    pdf = jnp.exp(-0.5 * (d / sigma) ** 2) / (sigma * jnp.sqrt(2.0 * jnp.pi))
    cond_e = jnp.sum(pdf * ev_s[None, :] / (n * an) + 1e-32, axis=1)
    cdf = 0.5 * (1.0 + jax.scipy.special.erf(d / (sigma * jnp.sqrt(2.0))))
    surv = jnp.sum(cdf / n, axis=1)
    return -jnp.sum((jnp.log(cond_e) - jnp.log(surv) + th_s) * ev_s / n)


if __name__ == "__main__":
    key = jax.random.PRNGKey(0)
    k1, k2, k3 = jax.random.split(key, 3)

    # Test 1: small batch (single tile), default tile selection.
    n = 8
    theta = jax.random.normal(k1, (n, 1), dtype=jnp.float32)             # DNN output
    durations = jax.random.uniform(k2, (n,), minval=0.5, maxval=5.0,
                                   dtype=jnp.float32)                    # observed times
    events = (jax.random.uniform(k3, (n,)) > 0.3).astype(jnp.float32)    # censoring ind.
    events = events.at[0].set(1.0)                                       # >=1 event

    loss_mod = DARTNKSPLLoss(an=1.0, sigma=1.0)
    loss = jax.block_until_ready(loss_mod(theta, durations, events))
    ref = jax.block_until_ready(_dart_nkspl_loss_ref(theta, durations, events,
                                                     an=1.0, sigma=1.0))
    assert jnp.isfinite(loss), "kernel produced non-finite loss"
    assert jnp.allclose(loss, ref, rtol=5e-3, atol=1e-3), (loss, ref)

    # Test 2: non-aligned n with forced small tiles -> multi-tile grid,
    # exercises padding, the j-axis accumulation and the parallel i axis.
    n2 = 300
    kk1, kk2, kk3 = jax.random.split(jax.random.PRNGKey(1), 3)
    theta2 = jax.random.normal(kk1, (n2, 1), dtype=jnp.float32)
    durations2 = jax.random.uniform(kk2, (n2,), minval=0.1, maxval=10.0,
                                    dtype=jnp.float32)
    events2 = (jax.random.uniform(kk3, (n2,)) > 0.4).astype(jnp.float32)
    events2 = events2.at[0].set(1.0)
    ref2 = jax.block_until_ready(_dart_nkspl_loss_ref(theta2, durations2, events2,
                                                      an=0.7, sigma=1.3))

    loss2 = jax.block_until_ready(
        dart_nkspl_loss_pallas(theta2, durations2, events2,
                               an=0.7, sigma=1.3, tm=64, tn=128))
    assert jnp.isfinite(loss2), "kernel produced non-finite loss (tiled case)"
    assert jnp.allclose(loss2, ref2, rtol=5e-3, atol=1e-3), (loss2, ref2)

    # Test 3: default tile selection for n=300 (>=2 row tiles -> megacore path).
    loss3 = jax.block_until_ready(
        dart_nkspl_loss_pallas(theta2, durations2, events2, an=0.7, sigma=1.3))
    assert jnp.isfinite(loss3), "kernel produced non-finite loss (default tiles)"
    assert jnp.allclose(loss3, ref2, rtol=5e-3, atol=1e-3), (loss3, ref2)

    print("KERNEL_OK")
</pallas_src>

<mosaic_0001>
module attributes {stable_mosaic.version = 11 : i64} {
  func.func @kernel(%arg0: i32, %arg1: i32, %arg2: memref<8x1xf32, #tpu.memory_space<vmem>>, %arg3: memref<1x128xf32, #tpu.memory_space<vmem>>, %arg4: memref<1x128xf32, #tpu.memory_space<vmem>>, %arg5: memref<8x2xf32, #tpu.memory_space<vmem>>, %arg6: memref<8x1xf32, #tpu.memory_space<vmem>>, %arg7: memref<8x1xf32, #tpu.memory_space<vmem>>, %arg8: memref<8x1xf32, #tpu.memory_space<vmem>>) attributes {dimension_semantics = [#tpu.dimension_semantics<parallel>, #tpu.dimension_semantics<arbitrary>], iteration_bounds = array<i64: 1, 1>, scalar_prefetch = 0 : i64, scratch_operands = 2 : i64, tpu.core_type = #tpu.core_type<tc>, window_params = [{transform_indices = @transform_0, window_bounds = array<i64: 8, 1>}, {transform_indices = @transform_1, window_bounds = array<i64: 1, 128>}, {transform_indices = @transform_2, window_bounds = array<i64: 1, 128>}, {transform_indices = @transform_3, window_bounds = array<i64: 8, 2>}, {transform_indices = @transform_4, window_bounds = array<i64: 8, 1>}]} {
    %c0_i32 = arith.constant 0 : i32
    %0 = arith.cmpi eq, %arg1, %c0_i32 : i32
    %1 = arith.extui %0 : i1 to i32
    %c0_i32_0 = arith.constant 0 : i32
    %2 = arith.cmpi ne, %1, %c0_i32_0 : i32
    scf.if %2 {
      %cst_21 = arith.constant 0.000000e+00 : f32
      %36 = vector.broadcast %cst_21 : f32 to vector<8x1xf32>
      %c0_22 = arith.constant 0 : index
      %c0_23 = arith.constant 0 : index
      %37 = vector.load %arg7[%c0_22, %c0_23] : memref<8x1xf32, #tpu.memory_space<vmem>>, vector<8x1xf32>
      tpu.vector_store %arg7[%c0_22, %c0_23], %36 {strides = array<i32>} : memref<8x1xf32, #tpu.memory_space<vmem>>, vector<8x1xf32>,
      %cst_24 = arith.constant 0.000000e+00 : f32
      %38 = vector.broadcast %cst_24 : f32 to vector<8x1xf32>
      %c0_25 = arith.constant 0 : index
      %c0_26 = arith.constant 0 : index
      %39 = vector.load %arg8[%c0_25, %c0_26] : memref<8x1xf32, #tpu.memory_space<vmem>>, vector<8x1xf32>
      tpu.vector_store %arg8[%c0_25, %c0_26], %38 {strides = array<i32>} : memref<8x1xf32, #tpu.memory_space<vmem>>, vector<8x1xf32>,
    } else {
    }
    %c0 = arith.constant 0 : index
    %c0_1 = arith.constant 0 : index
    %3 = vector.load %arg2[%c0, %c0_1] : memref<8x1xf32, #tpu.memory_space<vmem>>, vector<8x1xf32>
    %c0_2 = arith.constant 0 : index
    %c0_3 = arith.constant 0 : index
    %4 = vector.load %arg3[%c0_2, %c0_3] : memref<1x128xf32, #tpu.memory_space<vmem>>, vector<1x128xf32>
    %5 = vector.broadcast %3 : vector<8x1xf32> to vector<8x128xf32>
    %6 = vector.broadcast %4 : vector<1x128xf32> to vector<8x128xf32>
    %7 = arith.subf %5, %6 : vector<8x128xf32>
    %cst = arith.constant 0.707106769 : f32
    %8 = vector.broadcast %cst : f32 to vector<8x128xf32>
    %9 = arith.mulf %7, %8 : vector<8x128xf32>
    %10 = arith.mulf %9, %9 : vector<8x128xf32>
    %cst_4 = arith.constant 0.000000e+00 : f32
    %11 = vector.broadcast %cst_4 : f32 to vector<8x128xf32>
    %12 = arith.subf %11, %10 : vector<8x128xf32>
    %13 = math.exp %12 : vector<8x128xf32>
    %c0_5 = arith.constant 0 : index
    %c0_6 = arith.constant 0 : index
    %14 = vector.load %arg7[%c0_5, %c0_6] : memref<8x1xf32, #tpu.memory_space<vmem>>, vector<8x1xf32>
    %c0_7 = arith.constant 0 : index
    %c0_8 = arith.constant 0 : index
    %15 = vector.load %arg4[%c0_7, %c0_8] : memref<1x128xf32, #tpu.memory_space<vmem>>, vector<1x128xf32>
    %16 = vector.broadcast %15 : vector<1x128xf32> to vector<8x128xf32>
    %17 = arith.mulf %13, %16 : vector<8x128xf32>
    %cst_9 = arith.constant dense<0.000000e+00> : vector<8xf32>
    %18 = vector.multi_reduction <add>, %17, %cst_9 [1] : vector<8x128xf32> to vector<8xf32>
    %19 = vector.shape_cast %18 : vector<8xf32> to vector<8x1xf32>
    %20 = arith.addf %14, %19 : vector<8x1xf32>
    %c0_10 = arith.constant 0 : index
    %c0_11 = arith.constant 0 : index
    %21 = vector.load %arg7[%c0_10, %c0_11] : memref<8x1xf32, #tpu.memory_space<vmem>>, vector<8x1xf32>
    tpu.vector_store %arg7[%c0_10, %c0_11], %20 {strides = array<i32>} : memref<8x1xf32, #tpu.memory_space<vmem>>, vector<8x1xf32>,
    %cst_12 = arith.constant 0.100910947 : f32
    %22 = vector.broadcast %cst_12 : f32 to vector<8x128xf32>
    %23 = arith.mulf %22, %10 : vector<8x128xf32>
    %cst_13 = arith.constant 1.12837923 : f32
    %24 = vector.broadcast %cst_13 : f32 to vector<8x128xf32>
    %25 = arith.addf %24, %23 : vector<8x128xf32>
    %26 = arith.mulf %9, %25 : vector<8x128xf32>
    %27 = math.tanh %26 : vector<8x128xf32>
    %c0_14 = arith.constant 0 : index
    %c0_15 = arith.constant 0 : index
    %28 = vector.load %arg8[%c0_14, %c0_15] : memref<8x1xf32, #tpu.memory_space<vmem>>, vector<8x1xf32>
    %cst_16 = arith.constant dense<0.000000e+00> : vector<8xf32>
    %29 = vector.multi_reduction <add>, %27, %cst_16 [1] : vector<8x128xf32> to vector<8xf32>
    %30 = vector.shape_cast %29 : vector<8xf32> to vector<8x1xf32>
    %31 = arith.addf %28, %30 : vector<8x1xf32>
    %c0_17 = arith.constant 0 : index
    %c0_18 = arith.constant 0 : index
    %32 = vector.load %arg8[%c0_17, %c0_18] : memref<8x1xf32, #tpu.memory_space<vmem>>, vector<8x1xf32>
    tpu.vector_store %arg8[%c0_17, %c0_18], %31 {strides = array<i32>} : memref<8x1xf32, #tpu.memory_space<vmem>>, vector<8x1xf32>,
    %c0_i32_19 = arith.constant 0 : i32
    %33 = arith.cmpi eq, %arg1, %c0_i32_19 : i32
    %34 = arith.extui %33 : i1 to i32
    %c0_i32_20 = arith.constant 0 : i32
    %35 = arith.cmpi ne, %34, %c0_i32_20 : i32
    scf.if %35 {
      %c0_21 = arith.constant 0 : index
      %c0_22 = arith.constant 0 : index
      %36 = vector.load %arg5[%c0_21, %c0_22] : memref<8x2xf32, #tpu.memory_space<vmem>>, vector<8x2xf32>
      %37 = vector.extract_strided_slice %36 {offsets = [0, 0], sizes = [8, 1], strides = [1, 1]} : vector<8x2xf32> to vector<8x1xf32>
      %38 = vector.extract_strided_slice %36 {offsets = [0, 1], sizes = [8, 1], strides = [1, 1]} : vector<8x2xf32> to vector<8x1xf32>
      %c0_23 = arith.constant 0 : index
      %c0_24 = arith.constant 0 : index
      %39 = vector.load %arg7[%c0_23, %c0_24] : memref<8x1xf32, #tpu.memory_space<vmem>>, vector<8x1xf32>
      %cst_25 = arith.constant 0.0498677865 : f32
      %40 = vector.broadcast %cst_25 : f32 to vector<8x1xf32>
      %41 = arith.mulf %39, %40 : vector<8x1xf32>
      %cst_26 = arith.constant 8.000000e-32 : f32
      %42 = vector.broadcast %cst_26 : f32 to vector<8x1xf32>
      %43 = arith.addf %41, %42 : vector<8x1xf32>
      %c0_27 = arith.constant 0 : index
      %c0_28 = arith.constant 0 : index
      %44 = vector.load %arg8[%c0_27, %c0_28] : memref<8x1xf32, #tpu.memory_space<vmem>>, vector<8x1xf32>
      %cst_29 = arith.constant 1.280000e+02 : f32
      %45 = vector.broadcast %cst_29 : f32 to vector<8x1xf32>
      %46 = arith.addf %44, %45 : vector<8x1xf32>
      %cst_30 = arith.constant 6.250000e-02 : f32
      %47 = vector.broadcast %cst_30 : f32 to vector<8x1xf32>
      %48 = arith.mulf %46, %47 : vector<8x1xf32>
      %49 = math.log %43 : vector<8x1xf32>
      %50 = math.log %48 : vector<8x1xf32>
      %51 = arith.subf %49, %50 : vector<8x1xf32>
      %52 = arith.addf %51, %38 : vector<8x1xf32>
      %cst_31 = arith.constant -1.250000e-01 : f32
      %53 = vector.broadcast %cst_31 : f32 to vector<8x1xf32>
      %54 = arith.mulf %37, %53 : vector<8x1xf32>
      %55 = arith.mulf %52, %54 : vector<8x1xf32>
      %cst_32 = arith.constant 0.000000e+00 : f32
      %56 = vector.broadcast %cst_32 : f32 to vector<8x1xf32>
      %57 = arith.cmpf ogt, %37, %56 : vector<8x1xf32>
      %cst_33 = arith.constant 0.000000e+00 : f32
      %58 = vector.broadcast %cst_33 : f32 to vector<8x1xf32>
      %59 = arith.select %57, %55, %58 : vector<8x1xi1>, vector<8x1xf32>
      %c0_34 = arith.constant 0 : index
      %c0_35 = arith.constant 0 : index
      %60 = vector.load %arg6[%c0_34, %c0_35] : memref<8x1xf32, #tpu.memory_space<vmem>>, vector<8x1xf32>
      tpu.vector_store %arg6[%c0_34, %c0_35], %59 {strides = array<i32>} : memref<8x1xf32, #tpu.memory_space<vmem>>, vector<8x1xf32>,
    } else {
    }
    return
  }
  func.func @transform_0(%arg0: i32, %arg1: i32) -> (i32, i32) {
    %c0_i32 = arith.constant 0 : i32
    %c0_i32_0 = arith.constant 0 : i32
    return %arg0, %c0_i32 : i32, i32
  }
  func.func @transform_1(%arg0: i32, %arg1: i32) -> (i32, i32) {
    %c0_i32 = arith.constant 0 : i32
    %c0_i32_0 = arith.constant 0 : i32
    return %c0_i32, %arg1 : i32, i32
  }
  func.func @transform_2(%arg0: i32, %arg1: i32) -> (i32, i32) {
    %c0_i32 = arith.constant 0 : i32
    %c0_i32_0 = arith.constant 0 : i32
    return %c0_i32, %arg1 : i32, i32
  }
  func.func @transform_3(%arg0: i32, %arg1: i32) -> (i32, i32) {
    %c0_i32 = arith.constant 0 : i32
    %c0_i32_0 = arith.constant 0 : i32
    return %arg0, %c0_i32 : i32, i32
  }
  func.func @transform_4(%arg0: i32, %arg1: i32) -> (i32, i32) {
    %c0_i32 = arith.constant 0 : i32
    %c0_i32_0 = arith.constant 0 : i32
    return %arg0, %c0_i32 : i32, i32
  }
}

</mosaic_0001>

<llo_original>
// kernel: tpu_custom_call.1
$region0: #{tpu_custom_call.1}
  #allocation0 [shape = 'u32[]', space=smem, size = 0x4, offset = 0x4, fixed_abs, tag = 'smem constant byte address 0x4 - core index']
  #allocation1 [shape = 'u32[144,128]{1,0:T(1,128)}', space=vmem, size = 0x12000, scoped, tag = 'internal scratch']
  #allocation2 [shape = 'f32[8,1]{1,0:T(8,128)}', space=vmem, size = 0x1000, scoped, tag = 'scratch operand']
  #allocation3 [shape = 'f32[8,1]{1,0:T(8,128)}', space=vmem, size = 0x1000, scoped, tag = 'scratch operand']
  %s0 = inlined_call_operand.vmem [shape: f32[8,1], index: 0, kind: input, shape index: {}]
  %s1 = inlined_call_operand.vmem [shape: f32[1,128], index: 1, kind: input, shape index: {}]
  %s2 = inlined_call_operand.vmem [shape: f32[1,128], index: 2, kind: input, shape index: {}]
  %s3 = inlined_call_operand.vmem [shape: f32[8,2], index: 3, kind: input, shape index: {}]
  %s4 = inlined_call_operand.vmem [shape: f32[8,1], index: 4, kind: output, shape index: {}]
  %s5 = sld [smem:[#allocation0]]
  $region34: #{tpu_custom_call.1} parent=0
    _
  %s7 = ssub.s32 1, %s5
  %s8 = scalar_select 0, %s7, %s5
  // Predicated region
  $region2: #{tpu_custom_call.1} parent=0 // pred_check
    _
  $region3: #{tpu_custom_call.1} parent=0 // pred_check_branch
    %10 = sbr.rel (0) target = $region5
  $region4: #{tpu_custom_call.1} parent=0 // pred_region
    _
  $region5: #{tpu_custom_call.1} parent=0 // pred_fallthru
    _
  // Predicated region
  $region6: #{tpu_custom_call.1} parent=0 // pred_check
    _
  $region7: #{tpu_custom_call.1} parent=0 // pred_check_branch
    %12 = sbr.rel (0) target = $region9
  $region8: #{tpu_custom_call.1} parent=0 // pred_region
    _
  $region9: #{tpu_custom_call.1} parent=0 // pred_fallthru
    _
  // Predicated region
  $region10: #{tpu_custom_call.1} parent=0 // pred_check
    _
  $region11: #{tpu_custom_call.1} parent=0 // pred_check_branch
    %14 = sbr.rel (0) target = $region13
  $region12: #{tpu_custom_call.1} parent=0 // pred_region
    _
  $region13: #{tpu_custom_call.1} parent=0 // pred_fallthru
    _
  // Predicated region
  $region14: #{tpu_custom_call.1} parent=0 // pred_check
    _
  $region15: #{tpu_custom_call.1} parent=0 // pred_check_branch
    %16 = sbr.rel (0) target = $region17
  $region16: #{tpu_custom_call.1} parent=0 // pred_region
    _
  $region17: #{tpu_custom_call.1} parent=0 // pred_fallthru
    _
  %p17 = scmp.eq.s32.totalorder 0, 0
  // Predicated region
  $region18: #{tpu_custom_call.1} parent=0 // pred_check
    %p18 = pneg %p17
  $region19: #{tpu_custom_call.1} parent=0 // pred_check_branch
    %20 = sbr.rel (%p18) target = $region21
  $region20: #{tpu_custom_call.1} parent=0 // pred_region
    %vm21 = vcmask 7168
    %22 = vst.msk [vmem:[#allocation2] sm:$0xff] %vm21, 0.0
    %23 = vst.msk [vmem:[#allocation3] sm:$0xff] %vm21, 0.0
  $region21: #{tpu_custom_call.1} parent=0 // pred_fallthru
    _
  %v24 = vld [vmem:[%s0] sm:$0xff]
  %v25 = vld [vmem:[%s1] sm:$0x1]
  %27 = vset.pattern.permute.xlu0 0
  %28 = vperm.xlu0 %27, %v24
  %v29 = vpop.permute.xlu0 %28
  %v32 = vlaneseq
  %v33 = vshrl.u32 %v32, 7
  %v34 = vsub.s32 0, %v33
  %v35 = vrot.slane %v25, %v34
  %v37 = vsub.f32 %v29, %v35
  %v38 = vmul.f32 %v37, 0.70710677
  %v39 = vmul.f32 %v38, %v38
  %v40 = vsub.f32 0.0, %v39
  %v41 = vmul.f32 %v40, 1.442695
  %v42 = vpow.pop %v41
  %v43 = vld [vmem:[#allocation2] sm:$0xff]
  %v44 = vld [vmem:[%s2] sm:$0x1]
  %v46 = vlaneseq
  %v47 = vshrl.u32 %v46, 7
  %v48 = vsub.s32 0, %v47
  %v49 = vrot.slane %v44, %v48
  %v51 = vmul.f32 %v42, %v49
  %52 = vadd.xlane.f32.xlu0 %v51
  %v53 = vpop.xlane.xlu0 %52
  %v54 = vadd.f32 %v43, %v53
  %vm55 = vcmask 7168
  %56 = vst.msk [vmem:[#allocation2] sm:$0xff] %vm55, %v54
  %v57 = vmul.f32 %v39, 0.10091095
  %v58 = vadd.f32 %v57, 1.1283792
  %v59 = vmul.f32 %v38, %v58
  %v60 = vtanh.pop %v59
  %v61 = vld [vmem:[#allocation3] sm:$0xff]
  %62 = vadd.xlane.f32.xlu0 %v60
  %v63 = vpop.xlane.xlu0 %62
  %v64 = vadd.f32 %v61, %v63
  %65 = vst.msk [vmem:[#allocation3] sm:$0xff] %vm55, %v64
  // Predicated region
  $region22: #{tpu_custom_call.1} parent=0 // pred_check
    %p66 = pneg %p17
  $region23: #{tpu_custom_call.1} parent=0 // pred_check_branch
    %68 = sbr.rel (%p66) target = $region25
  $region24: #{tpu_custom_call.1} parent=0 // pred_region
    %v69 = vld [vmem:[%s3] sm:$0xff]
    %v70 = vld [vmem:[#allocation2] sm:$0xff]
    %v71 = vmul.f32 %v70, 0.049867786
    %v72 = vadd.f32 %v71, 8e-32
    %v73 = vld [vmem:[#allocation3] sm:$0xff]
    %v74 = vadd.f32 %v73, 128.0
    %v75 = vmul.f32 %v74, 0.0625
    %v76 = vlog2.pop %v72
    %v77 = vmul.f32 %v76, 0.6931472
    %v78 = vlog2.pop %v75
    %v79 = vmul.f32 %v78, 0.6931472
    %v80 = vsub.f32 %v77, %v79
    %82 = vrot.lane.b32.xlu0 %v69, 127
    %v83 = vpop.permute.xlu0 %82
    %v85 = vadd.f32 %v80, %v83
    %v86 = vmul.f32 %v69, -0.125
    %v87 = vmul.f32 %v85, %v86
    %vm88 = vcmp.gt.f32.partialorder %v69, 0.0
    %v89 = vsel %vm88, %v87, 0.0
    %90 = vst.msk [vmem:[%s4] sm:$0xff] %vm55, %v89
  $region25: #{tpu_custom_call.1} parent=0 // pred_fallthru
    _
  // Predicated region
  $region26: #{tpu_custom_call.1} parent=0 // pred_check
    _
  $region27: #{tpu_custom_call.1} parent=0 // pred_check_branch
    %92 = sbr.rel (0) target = $region29
  $region28: #{tpu_custom_call.1} parent=0 // pred_region
    _
  $region29: #{tpu_custom_call.1} parent=0 // pred_fallthru
    _
  // Predicated region
  $region30: #{tpu_custom_call.1} parent=0 // pred_check
    _
  $region31: #{tpu_custom_call.1} parent=0 // pred_check_branch
    %94 = sbr.rel (0) target = $region33
  $region32: #{tpu_custom_call.1} parent=0 // pred_region
    _
  $region33: #{tpu_custom_call.1} parent=0 // pred_fallthru
    _

</llo_original>
